<compile_context>
chip_gen: v7x
topology: tpu7x:2x2x1
jax: 0.10.0
libtpu: 0.0.40
codegen_flags: <defaults>
</compile_context>

<pallas_src>
import jax
import jax.numpy as jnp
from jax.experimental import pallas as pl
from jax.experimental.pallas import tpu as pltpu


def _noising_kernel(lat_ref, noise_ref, sa_ref, sb_ref, out_ref):
    # Shapes inside the kernel (grid = (B,), batch dim squeezed out):
    #   lat_ref:   (1, D)  latent row for sample i (lane-dense)
    #   noise_ref: (T, D)  gathered noise slabs, VMEM-resident across the whole grid
    #   sa_ref:    (T, 1)  vae_scaling * sqrt(alphas_cumprod[t_j])
    #   sb_ref:    (T, 1)  sqrt(1 - alphas_cumprod[t_j])
    #   out_ref:   (T, D)  noised latents for sample i, all timesteps in one shot
    out_ref[...] = lat_ref[...] * sa_ref[...] + noise_ref[...] * sb_ref[...]


def add_noise_pallas(latents, all_noise, alphas_cumprod, t_list, scaling_factor):
    """latents: (B, C, H, W) f32; all_noise: (NUM_T, C, H, W) f32;
    alphas_cumprod: (NUM_T,) f32; t_list: (T,) int32.
    Returns (B, T, C, H, W) f32 noised latents."""
    B, C, H, W = latents.shape
    T = int(t_list.shape[0])
    D = C * H * W  # lane-dense flattened feature axis

    t_idx = t_list.astype(jnp.int32)
    acp_t = alphas_cumprod[t_idx].astype(jnp.float32)
    # Fold the VAE scaling factor (latents = latents * scaling_factor) into the
    # per-timestep latent coefficient -> single fused FMA pair inside the kernel.
    sqrt_a = (jnp.float32(scaling_factor) * jnp.sqrt(acp_t)).reshape(T, 1)
    sqrt_b = jnp.sqrt(1.0 - acp_t).astype(jnp.float32).reshape(T, 1)

    lat_flat = latents.reshape(B, 1, D)          # contiguous reshape (free)
    noise_t = all_noise[t_idx].reshape(T, D)     # gather the T slabs ONCE in JAX

    # VMEM budget: latent block + resident noise slab + coeffs + output block,
    # double-buffered. Cap at 48 MiB so it is safe on v7x (64 MiB physical) while
    # raising the 16 MiB v5e scoped default for larger real shapes.
    per_step_bytes = 4 * (D + T * D + 2 * T + T * D)
    vmem_limit = int(min(max(8 * per_step_bytes, 16 * 2**20), 48 * 2**20))

    grid_spec = pltpu.PrefetchScalarGridSpec(
        num_scalar_prefetch=0,
        grid=(B,),
        in_specs=[
            # latent row for sample i (batch dim squeezed)
            pl.BlockSpec((None, 1, D), lambda i: (i, 0, 0)),
            # gathered noise slabs: constant index_map -> stays resident in VMEM
            pl.BlockSpec((T, D), lambda i: (0, 0)),
            # per-timestep coefficients (tiny, resident)
            pl.BlockSpec((T, 1), lambda i: (0, 0)),
            pl.BlockSpec((T, 1), lambda i: (0, 0)),
        ],
        out_specs=pl.BlockSpec((None, T, D), lambda i: (i, 0, 0)),
    )

    cost = pl.CostEstimate(
        flops=3 * B * T * D,  # 2 mul + 1 add per output element
        transcendentals=0,
        bytes_accessed=4 * (B * T * D + B * D + T * D + 2 * T),
    )

    out = pl.pallas_call(
        _noising_kernel,
        out_shape=jax.ShapeDtypeStruct((B, T, D), jnp.float32),
        grid_spec=grid_spec,
        compiler_params=pltpu.CompilerParams(
            dimension_semantics=("parallel",),
            vmem_limit_bytes=vmem_limit,
        ),
        cost_estimate=cost,
    )(lat_flat, noise_t, sqrt_a, sqrt_b)

    return out.reshape(B, T, C, H, W)


if __name__ == "__main__":
    key = jax.random.PRNGKey(0)
    k_lat, k_noise = jax.random.split(key)

    # Small, latent-space-consistent shapes.
    B, C, H, W = 2, 4, 16, 16          # VAE latents (stand-in for vae.encode(images).mean)
    NUM_TRAIN_T = 20                    # scheduler.config.num_train_timesteps (small)
    scaling_factor = 0.18215            # vae.config.scaling_factor

    latents = jax.random.normal(k_lat, (B, C, H, W), dtype=jnp.float32)
    # all_noise = randn(num_train_timesteps, C, H, W) as in the PyTorch forward
    all_noise = jax.random.normal(k_noise, (NUM_TRAIN_T, C, H, W), dtype=jnp.float32)

    # Deterministic DDPM-style alphas_cumprod (linear beta schedule).
    betas = jnp.linspace(1e-4, 2e-2, NUM_TRAIN_T, dtype=jnp.float32)
    alphas_cumprod = jnp.cumprod(1.0 - betas)

    t_list = jnp.array([2, 7, 15], dtype=jnp.int32)

    out = add_noise_pallas(latents, all_noise, alphas_cumprod, t_list, scaling_factor)
    out = jax.block_until_ready(out)

    # Pure-JAX reference of the same math (noised latents per sample / timestep).
    acp_t = alphas_cumprod[t_list]
    ref = (
        (latents * scaling_factor)[:, None]
        * jnp.sqrt(acp_t)[None, :, None, None, None]
        + all_noise[t_list][None, :]
        * jnp.sqrt(1.0 - acp_t)[None, :, None, None, None]
    )
    assert out.shape == (B, t_list.shape[0], C, H, W)
    assert jnp.allclose(out, ref, atol=1e-5, rtol=1e-5)

    print("KERNEL_OK")
</pallas_src>

<mosaic_0001>
module attributes {stable_mosaic.version = 11 : i64} {
  func.func @_noising_kernel(%arg0: i32, %arg1: memref<1x1x1024xf32, #tpu.memory_space<vmem>>, %arg2: memref<3x1024xf32, #tpu.memory_space<vmem>>, %arg3: memref<3x1xf32, #tpu.memory_space<vmem>>, %arg4: memref<3x1xf32, #tpu.memory_space<vmem>>, %arg5: memref<1x3x1024xf32, #tpu.memory_space<vmem>>) attributes {dimension_semantics = [#tpu.dimension_semantics<parallel>], iteration_bounds = array<i64: 2>, scalar_prefetch = 0 : i64, scratch_operands = 0 : i64, tpu.core_type = #tpu.core_type<tc>, window_params = [{transform_indices = @transform_0, window_bounds = array<i64: 1, 1, 1024>}, {pipeline_mode = #tpu.pipeline_mode<synchronous>, transform_indices = @transform_1, window_bounds = array<i64: 3, 1024>}, {pipeline_mode = #tpu.pipeline_mode<synchronous>, transform_indices = @transform_2, window_bounds = array<i64: 3, 1>}, {pipeline_mode = #tpu.pipeline_mode<synchronous>, transform_indices = @transform_3, window_bounds = array<i64: 3, 1>}, {transform_indices = @transform_4, window_bounds = array<i64: 1, 3, 1024>}]} {
    %c0 = arith.constant 0 : index
    %c0_0 = arith.constant 0 : index
    %c0_1 = arith.constant 0 : index
    %0 = vector.load %arg1[%c0, %c0_0, %c0_1] : memref<1x1x1024xf32, #tpu.memory_space<vmem>>, vector<1x1x1024xf32>
    %1 = vector.shape_cast %0 : vector<1x1x1024xf32> to vector<1x1024xf32>
    %c0_2 = arith.constant 0 : index
    %c0_3 = arith.constant 0 : index
    %2 = vector.load %arg3[%c0_2, %c0_3] : memref<3x1xf32, #tpu.memory_space<vmem>>, vector<3x1xf32>
    %3 = vector.broadcast %1 : vector<1x1024xf32> to vector<3x1024xf32>
    %4 = vector.broadcast %2 : vector<3x1xf32> to vector<3x1024xf32>
    %5 = arith.mulf %3, %4 : vector<3x1024xf32>
    %c0_4 = arith.constant 0 : index
    %c0_5 = arith.constant 0 : index
    %6 = vector.load %arg2[%c0_4, %c0_5] : memref<3x1024xf32, #tpu.memory_space<vmem>>, vector<3x1024xf32>
    %c0_6 = arith.constant 0 : index
    %c0_7 = arith.constant 0 : index
    %7 = vector.load %arg4[%c0_6, %c0_7] : memref<3x1xf32, #tpu.memory_space<vmem>>, vector<3x1xf32>
    %8 = vector.broadcast %7 : vector<3x1xf32> to vector<3x1024xf32>
    %9 = arith.mulf %6, %8 : vector<3x1024xf32>
    %10 = arith.addf %5, %9 : vector<3x1024xf32>
    %c0_8 = arith.constant 0 : index
    %c0_9 = arith.constant 0 : index
    %c0_10 = arith.constant 0 : index
    %11 = vector.load %arg5[%c0_8, %c0_9, %c0_10] : memref<1x3x1024xf32, #tpu.memory_space<vmem>>, vector<1x3x1024xf32>
    %12 = vector.shape_cast %11 : vector<1x3x1024xf32> to vector<3x1024xf32>
    %13 = vector.shape_cast %10 : vector<3x1024xf32> to vector<1x3x1024xf32>
    tpu.vector_store %arg5[%c0_8, %c0_9, %c0_10], %13 {strides = array<i32>} : memref<1x3x1024xf32, #tpu.memory_space<vmem>>, vector<1x3x1024xf32>,
    return
  }
  func.func @transform_0(%arg0: i32) -> (i32, i32, i32) {
    %c0_i32 = arith.constant 0 : i32
    %c0_i32_0 = arith.constant 0 : i32
    %c0_i32_1 = arith.constant 0 : i32
    return %arg0, %c0_i32, %c0_i32_0 : i32, i32, i32
  }
  func.func @transform_1(%arg0: i32) -> (i32, i32) {
    %c0_i32 = arith.constant 0 : i32
    %c0_i32_0 = arith.constant 0 : i32
    %c0_i32_1 = arith.constant 0 : i32
    return %c0_i32, %c0_i32_0 : i32, i32
  }
  func.func @transform_2(%arg0: i32) -> (i32, i32) {
    %c0_i32 = arith.constant 0 : i32
    %c0_i32_0 = arith.constant 0 : i32
    %c0_i32_1 = arith.constant 0 : i32
    return %c0_i32, %c0_i32_0 : i32, i32
  }
  func.func @transform_3(%arg0: i32) -> (i32, i32) {
    %c0_i32 = arith.constant 0 : i32
    %c0_i32_0 = arith.constant 0 : i32
    %c0_i32_1 = arith.constant 0 : i32
    return %c0_i32, %c0_i32_0 : i32, i32
  }
  func.func @transform_4(%arg0: i32) -> (i32, i32, i32) {
    %c0_i32 = arith.constant 0 : i32
    %c0_i32_0 = arith.constant 0 : i32
    %c0_i32_1 = arith.constant 0 : i32
    return %arg0, %c0_i32, %c0_i32_0 : i32, i32, i32
  }
}

</mosaic_0001>

<llo_original>
// kernel: tpu_custom_call.1
$region0: #{tpu_custom_call.1}
  #allocation0 [shape = 'u32[]', space=smem, size = 0x4, offset = 0x4, fixed_abs, tag = 'smem constant byte address 0x4 - core index']
  #allocation1 [shape = 'u32[144,128]{1,0:T(1,128)}', space=vmem, size = 0x12000, scoped, tag = 'internal scratch']
  %s0 = inlined_call_operand.hbm [shape: f32[2,1,1024], index: 0, kind: input, shape index: {}]
  %s1 = inlined_call_operand.hbm [shape: f32[3,1024], index: 1, kind: input, shape index: {}]
  %s2 = inlined_call_operand.vmem [shape: f32[3,1], index: 2, kind: input, shape index: {}]
  %s3 = inlined_call_operand.vmem [shape: f32[3,1], index: 3, kind: input, shape index: {}]
  %s4 = inlined_call_operand.vmem [shape: f32[2,3,1024], index: 4, kind: output, shape index: {}]
  %s5 = sld [smem:[#allocation0]]
  $region57: #{tpu_custom_call.1} parent=0
    _
  %s7 = ssub.s32 1, %s5
  %s8 = scalar_select 0, %s7, %s5
  $region1: #{tpu_custom_call.1} parent=0
    #allocation2 [shape = 'u8[8192]{0}', space=vmem, size = 0x2000, scoped, tag = 'input window, operand 0']
    #allocation3 [shape = 's32[2]{0}', space=sflag, size = 0x8, scoped, tag = 'scoped memory for tpu_custom_call.1']
    #allocation4 [shape = 'u8[16384]{0}', space=vmem, size = 0x4000, scoped, tag = 'input window, operand 1, single buffered']
    #allocation5 [shape = 's32[1]{0}', space=sflag, size = 0x4, scoped, tag = 'scoped memory for tpu_custom_call.1']
    %9 = vsyncpa [#allocation3], 0
    %s10 = scalar_lea.sflag [#allocation3], 1
    %11 = vsyncpa %s10, 0
    %12 = vsyncpa [#allocation5], 0
    loop: start=0, step=1, limit=4
    $region2: #{tpu_custom_call.1} parent=1 // loop_pre_header
      _
    $region3: #{tpu_custom_call.1} parent=1 // loop_header
      %s14 = sphi 0, %s18
      %p15 = scmp.ge.s32.totalorder %s14, 4
      %s24 = sphi 0, %s26
      %s27 = sphi 0, %s24
      %s28 = sphi 0, %s27
      %s44 = sphi 0, %s28
      %s48 = sphi 0, %s48
      %s50 = sphi 0, %s48
      %s51 = sphi 0, %s50
      %s65 = sphi 0, %s51
      %s69 = sphi 0, %s69
      %s71 = sphi 0, %s69
      %s72 = sphi 0, %s71
      %s86 = sphi 0, %s72
      %s90 = sphi 0, %s90
      %s92 = sphi 0, %s90
      %s93 = sphi 0, %s92
      %s107 = sphi 0, %s93
      %s113 = sphi 0, %s115
      %s116 = sphi 0, %s113
      %s117 = sphi 0, %s116
      %s133 = sphi 0, %s117
    $region4: #{tpu_custom_call.1} parent=1 // loop_header_branch
      %17 = sbr.rel (%p15) target = $region8
    $region5: #{tpu_custom_call.1} parent=1 // loop_body
      %s19 = ssub.s32 %s14, 1
      %s20 = ssub.s32 %s14, 2
      %s21 = sadd.s32 %s14, 1
      %s22 = ssub.s32 %s14, %s21
      %p23 = scmp.eq.s32.totalorder %s22, 0
      %s25 = sadd.s32 %s24, 1
      %s26 = scalar_select %p23, %s24, %s25
      %p29 = pneg %p23
      %p30 = scmp.eq.s32.totalorder %s14, 1
      %p31 = por %p29, %p30
      %p32 = scmp.ne.s32.totalorder %s24, %s27
      %p33 = scmp.eq.s32.totalorder %s14, 0
      %p34 = por %p32, %p33
      %p35 = scmp.ne.s32.totalorder %s24, %s27
      %p36 = scmp.eq.s32.totalorder %s19, 1
      %p37 = por %p35, %p36
      %p38 = scmp.ne.s32.totalorder %s27, %s28
      %p39 = scmp.eq.s32.totalorder %s19, 0
      %p40 = por %p38, %p39
      %p41 = scmp.ne.s32.totalorder %s27, %s28
      %p42 = scmp.eq.s32.totalorder %s20, 1
      %p43 = por %p41, %p42
      %p45 = scmp.ne.s32.totalorder %s28, %s44
      %p46 = scmp.eq.s32.totalorder %s20, 0
      %p47 = por %p45, %p46
      %s49 = sadd.s32 %s48, 1
      %p52 = scmp.eq.s32.totalorder %s14, 1
      %p53 = scmp.ne.s32.totalorder %s48, %s50
      %p54 = scmp.eq.s32.totalorder %s14, 0
      %p55 = por %p53, %p54
      %p56 = scmp.ne.s32.totalorder %s48, %s50
      %p57 = scmp.eq.s32.totalorder %s19, 1
      %p58 = por %p56, %p57
      %p59 = scmp.ne.s32.totalorder %s50, %s51
      %p60 = scmp.eq.s32.totalorder %s19, 0
      %p61 = por %p59, %p60
      %p62 = scmp.ne.s32.totalorder %s50, %s51
      %p63 = scmp.eq.s32.totalorder %s20, 1
      %p64 = por %p62, %p63
      %p66 = scmp.ne.s32.totalorder %s51, %s65
      %p67 = scmp.eq.s32.totalorder %s20, 0
      %p68 = por %p66, %p67
      %s70 = sadd.s32 %s69, 1
      %p73 = scmp.eq.s32.totalorder %s14, 1
      %p74 = scmp.ne.s32.totalorder %s69, %s71
      %p75 = scmp.eq.s32.totalorder %s14, 0
      %p76 = por %p74, %p75
      %p77 = scmp.ne.s32.totalorder %s69, %s71
      %p78 = scmp.eq.s32.totalorder %s19, 1
      %p79 = por %p77, %p78
      %p80 = scmp.ne.s32.totalorder %s71, %s72
      %p81 = scmp.eq.s32.totalorder %s19, 0
      %p82 = por %p80, %p81
      %p83 = scmp.ne.s32.totalorder %s71, %s72
      %p84 = scmp.eq.s32.totalorder %s20, 1
      %p85 = por %p83, %p84
      %p87 = scmp.ne.s32.totalorder %s72, %s86
      %p88 = scmp.eq.s32.totalorder %s20, 0
      %p89 = por %p87, %p88
      %s91 = sadd.s32 %s90, 1
      %p94 = scmp.eq.s32.totalorder %s14, 1
      %p95 = scmp.ne.s32.totalorder %s90, %s92
      %p96 = scmp.eq.s32.totalorder %s14, 0
      %p97 = por %p95, %p96
      %p98 = scmp.ne.s32.totalorder %s90, %s92
      %p99 = scmp.eq.s32.totalorder %s19, 1
      %p100 = por %p98, %p99
      %p101 = scmp.ne.s32.totalorder %s92, %s93
      %p102 = scmp.eq.s32.totalorder %s19, 0
      %p103 = por %p101, %p102
      %p104 = scmp.ne.s32.totalorder %s92, %s93
      %p105 = scmp.eq.s32.totalorder %s20, 1
      %p106 = por %p104, %p105
      %p108 = scmp.ne.s32.totalorder %s93, %s107
      %p109 = scmp.eq.s32.totalorder %s20, 0
      %p110 = por %p108, %p109
      %s111 = ssub.s32 %s14, %s21
      %p112 = scmp.eq.s32.totalorder %s111, 0
      %s114 = sadd.s32 %s113, 1
      %s115 = scalar_select %p112, %s113, %s114
      %p118 = pneg %p112
      %p119 = scmp.eq.s32.totalorder %s14, 1
      %p120 = por %p118, %p119
      %p121 = scmp.ne.s32.totalorder %s113, %s116
      %p122 = scmp.eq.s32.totalorder %s14, 0
      %p123 = por %p121, %p122
      %p124 = scmp.ne.s32.totalorder %s113, %s116
      %p125 = scmp.eq.s32.totalorder %s19, 1
      %p126 = por %p124, %p125
      %p127 = scmp.ne.s32.totalorder %s116, %s117
      %p128 = scmp.eq.s32.totalorder %s19, 0
      %p129 = por %p127, %p128
      %p130 = scmp.ne.s32.totalorder %s116, %s117
      %p131 = scmp.eq.s32.totalorder %s20, 1
      %p132 = por %p130, %p131
      %p134 = scmp.ne.s32.totalorder %s117, %s133
      %p135 = scmp.eq.s32.totalorder %s20, 0
      %p136 = por %p134, %p135
      %p137 = scmp.le.s32.totalorder 1, %s14
      %p138 = scmp.lt.s32.totalorder %s14, 3
      %p139 = pnand %p137, %p138
      %p140 = pneg %p139
      // Predicated region
      $region9: #{tpu_custom_call.1} parent=5 // pred_check
        _
      $region10: #{tpu_custom_call.1} parent=5 // pred_check_branch
        %142 = sbr.rel (%p139) target = $region12
      $region11: #{tpu_custom_call.1} parent=5 // pred_region
        %s143 = ssub.s32 %s14, 1
        // Predicated region
        $region13: #{tpu_custom_call.1} parent=11 // pred_check
          %p144 = pneg %p61
        $region14: #{tpu_custom_call.1} parent=11 // pred_check_branch
          %146 = sbr.rel (%p144) target = $region16
        $region15: #{tpu_custom_call.1} parent=11 // pred_region
          %s148 = ssub.s32 512, 512
          %149 = vsyncadd [#allocation5], %s148
          %s151 = sshll.u32 [#allocation4], 4
          %s152 = int_to_ptr.vmem [resolvable:$true] %s151
          %154 = dma.hbm_to_vmem [thread:$0]  %s1, 512, %s152, [#allocation5]
        $region16: #{tpu_custom_call.1} parent=11 // pred_fallthru
          _
        // Predicated region
        $region17: #{tpu_custom_call.1} parent=11 // pred_check
          %p155 = pneg %p82
        $region18: #{tpu_custom_call.1} parent=11 // pred_check_branch
          %157 = sbr.rel (%p155) target = $region20
        $region19: #{tpu_custom_call.1} parent=11 // pred_region
          _
        $region20: #{tpu_custom_call.1} parent=11 // pred_fallthru
          _
        // Predicated region
        $region21: #{tpu_custom_call.1} parent=11 // pred_check
          %p158 = pneg %p103
        $region22: #{tpu_custom_call.1} parent=11 // pred_check_branch
          %160 = sbr.rel (%p158) target = $region24
        $region23: #{tpu_custom_call.1} parent=11 // pred_region
          _
        $region24: #{tpu_custom_call.1} parent=11 // pred_fallthru
          _
      $region12: #{tpu_custom_call.1} parent=5 // pred_fallthru
        _
      %p161 = scmp.lt.s32.totalorder %s14, 2
      // Predicated region
      $region25: #{tpu_custom_call.1} parent=5 // pred_check
        %p162 = pneg %p161
      $region26: #{tpu_custom_call.1} parent=5 // pred_check_branch
        %164 = sbr.rel (%p162) target = $region28
      $region27: #{tpu_custom_call.1} parent=5 // pred_region
        // Predicated region
        $region29: #{tpu_custom_call.1} parent=27 // pred_check
          %p165 = pneg %p34
        $region30: #{tpu_custom_call.1} parent=27 // pred_check_branch
          %167 = sbr.rel (%p165) target = $region32
        $region31: #{tpu_custom_call.1} parent=27 // pred_region
          %s168 = sand.u32 %s24, 1
          %s169 = scalar_lea.sflag [#allocation3], %s168
          %s170 = sand.u32 %s24, 1
          %s171 = smul.addr %s170, 8
          %s172 = scalar_lea.vmem [#allocation2], %s171
          %s174 = ssub.s32 128, 128
          %175 = vsyncadd %s169, %s174
          %s176 = smul.addr %s14, 8
          %s177 = smul.addr %s176, 16
          %s178 = scalar_lea.hbm %s0, %s177
          %s180 = sshll.u32 %s172, 4
          %s181 = int_to_ptr.vmem [resolvable:$true] %s180
          %183 = dma.hbm_to_vmem [thread:$0]  %s178, 128, %s181, %s169
        $region32: #{tpu_custom_call.1} parent=27 // pred_fallthru
          _
      $region28: #{tpu_custom_call.1} parent=5 // pred_fallthru
        _
      %p184 = scmp.le.s32.totalorder 1, %s14
      %p185 = scmp.lt.s32.totalorder %s14, 3
      %p186 = pnand %p184, %p185
      %p187 = pneg %p186
      // Predicated region
      $region33: #{tpu_custom_call.1} parent=5 // pred_check
        _
      $region34: #{tpu_custom_call.1} parent=5 // pred_check_branch
        %189 = sbr.rel (%p186) target = $region36
      $region35: #{tpu_custom_call.1} parent=5 // pred_region
        %s190 = ssub.s32 %s14, 1
        %s191 = sand.u32 %s27, 1
        %s192 = scalar_lea.sflag [#allocation3], %s191
        %s193 = sand.u32 %s27, 1
        %s194 = smul.addr %s193, 8
        %s195 = scalar_lea.vmem [#allocation2], %s194
        // Predicated region
        $region37: #{tpu_custom_call.1} parent=35 // pred_check
          %p196 = pneg %p40
        $region38: #{tpu_custom_call.1} parent=35 // pred_check_branch
          %198 = sbr.rel (%p196) target = $region40
        $region39: #{tpu_custom_call.1} parent=35 // pred_region
          %199 = dma.done %s192, 128
        $region40: #{tpu_custom_call.1} parent=35 // pred_fallthru
          _
        // Predicated region
        $region41: #{tpu_custom_call.1} parent=35 // pred_check
          %p200 = pneg %p61
        $region42: #{tpu_custom_call.1} parent=35 // pred_check_branch
          %202 = sbr.rel (%p200) target = $region44
        $region43: #{tpu_custom_call.1} parent=35 // pred_region
          %203 = dma.done [#allocation5], 512
        $region44: #{tpu_custom_call.1} parent=35 // pred_fallthru
          _
        %s204 = sand.u32 %s27, 1
        %s205 = scalar_lea.sflag [#allocation3], %s204
        %s206 = sand.u32 %s27, 1
        %s207 = smul.addr %s206, 8
        %s208 = scalar_lea.vmem [#allocation2], %s207
        %p209 = pneg %p40
        %p210 = pneg %p37
        %p211 = pneg %p61
        %p212 = pneg %p58
        %p213 = pneg %p82
        %p214 = pneg %p79
        %p215 = pneg %p103
        %p216 = pneg %p100
        %p217 = pneg %p129
        %p218 = pneg %p126
        %p219 = scmp.lt.s32.totalorder %s19, 1
        %s220 = scalar_select %p219, %s19, 1
        %s221 = smul.addr %s220, 8
        %s222 = smul.addr %s221, 4
        %s223 = scalar_lea.vmem %s4, %s222
        %p224 = scmp.lt.s32.totalorder %s19, 1
        %s225 = scalar_select %p224, %s19, 1
        %s226 = smul.addr %s225, 8
        %s227 = smul.addr %s226, 4
        %s228 = scalar_lea.vmem %s4, %s227
        %v229 = vld [vmem:[%s195] sm:$0xff]
        %v230 = vld [vmem:[%s2] sm:$0x7]
        %v232 = vlaneseq
        %v233 = vshrl.u32 %v232, 7
        %v234 = vsub.s32 0, %v233
        %v235 = vrot.slane %v229, %v234
        %v236 = vlaneseq
        %v237 = vshrl.u32 %v236, 7
        %v238 = vsub.s32 1, %v237
        %v239 = vrot.slane %v229, %v238
        %v240 = vlaneseq
        %v241 = vshrl.u32 %v240, 7
        %v242 = vsub.s32 2, %v241
        %v243 = vrot.slane %v229, %v242
        %v244 = vlaneseq
        %v245 = vshrl.u32 %v244, 7
        %v246 = vsub.s32 3, %v245
        %v247 = vrot.slane %v229, %v246
        %v248 = vlaneseq
        %v249 = vshrl.u32 %v248, 7
        %v250 = vsub.s32 4, %v249
        %v251 = vrot.slane %v229, %v250
        %v252 = vlaneseq
        %v253 = vshrl.u32 %v252, 7
        %v254 = vsub.s32 5, %v253
        %v255 = vrot.slane %v229, %v254
        %v256 = vlaneseq
        %v257 = vshrl.u32 %v256, 7
        %v258 = vsub.s32 6, %v257
        %v259 = vrot.slane %v229, %v258
        %v260 = vlaneseq
        %v261 = vshrl.u32 %v260, 7
        %v262 = vsub.s32 7, %v261
        %v263 = vrot.slane %v229, %v262
        %273 = vset.pattern.permute.xlu0 0
        %274 = vperm.xlu0 %273, %v230
        %v275 = vpop.permute.xlu0 %274
        %v277 = vmul.f32 %v235, %v275
        %v278 = vmul.f32 %v239, %v275
        %v279 = vmul.f32 %v243, %v275
        %v280 = vmul.f32 %v247, %v275
        %v281 = vmul.f32 %v251, %v275
        %v282 = vmul.f32 %v255, %v275
        %v283 = vmul.f32 %v259, %v275
        %v284 = vmul.f32 %v263, %v275
        %v285 = vld [vmem:[#allocation4] sm:$0x77]
        %v286 = vld [vmem:[#allocation4 + $0x8] sm:$0x77]
        %v287 = vld [vmem:[#allocation4 + $0x10] sm:$0x77]
        %v288 = vld [vmem:[#allocation4 + $0x18] sm:$0x77]
        %v289 = vld [vmem:[%s3] sm:$0x7]
        %291 = vset.pattern.permute.xlu0 0
        %292 = vperm.xlu0 %291, %v289
        %v293 = vpop.permute.xlu0 %292
        %v295 = vunpack.c.l.s4 839922192
        %v296 = vunpack.c.0.s8 %v295
        %v297 = vlaneseq
        %v298 = vshrl.u32 %v297, 7
        %v299 = vsub.s32 %v296, %v298
        %v300 = vrot.slane %v293, %v299
        %v302 = vmul.f32 %v285, %v300
        %v303 = vmul.f32 %v286, %v300
        %v304 = vmul.f32 %v287, %v300
        %v305 = vmul.f32 %v288, %v300
        %v310 = vcombine.high %v302, %v302
        %v311 = vcombine.high %v303, %v303
        %v312 = vcombine.high %v304, %v304
        %v313 = vcombine.high %v305, %v305
        %v318 = vadd.f32 %v277, %v302
        %v319 = vadd.f32 %v278, %v310
        %v320 = vadd.f32 %v279, %v303
        %v321 = vadd.f32 %v280, %v311
        %v322 = vadd.f32 %v281, %v304
        %v323 = vadd.f32 %v282, %v312
        %v324 = vadd.f32 %v283, %v305
        %v325 = vadd.f32 %v284, %v313
        %v334 = vcombine.low %v318, %v319
        %v335 = vcombine.low %v320, %v321
        %v336 = vcombine.low %v322, %v323
        %v337 = vcombine.low %v324, %v325
        %342 = vst [vmem:[%s228] sm:$0x77] %v334
        %343 = vst [vmem:[%s228 + $0x8] sm:$0x77] %v335
        %344 = vst [vmem:[%s228 + $0x10] sm:$0x77] %v336
        %345 = vst [vmem:[%s228 + $0x18] sm:$0x77] %v337
        %p346 = scmp.lt.s32.totalorder %s19, 1
        %s347 = scalar_select %p346, %s19, 1
        %s348 = smul.addr %s347, 8
        %s349 = smul.addr %s348, 4
        %s350 = scalar_lea.vmem %s4, %s349
        // Predicated region
        $region45: #{tpu_custom_call.1} parent=35 // pred_check
          %p351 = pneg %p126
        $region46: #{tpu_custom_call.1} parent=35 // pred_check_branch
          %353 = sbr.rel (%p351) target = $region48
        $region47: #{tpu_custom_call.1} parent=35 // pred_region
          _
        $region48: #{tpu_custom_call.1} parent=35 // pred_fallthru
          _
      $region36: #{tpu_custom_call.1} parent=5 // pred_fallthru
        _
      %p354 = scmp.le.s32.totalorder 2, %s14
      // Predicated region
      $region49: #{tpu_custom_call.1} parent=5 // pred_check
        %p355 = pneg %p354
      $region50: #{tpu_custom_call.1} parent=5 // pred_check_branch
        %357 = sbr.rel (%p355) target = $region52
      $region51: #{tpu_custom_call.1} parent=5 // pred_region
        %s358 = ssub.s32 %s14, 2
        // Predicated region
        $region53: #{tpu_custom_call.1} parent=51 // pred_check
          %p359 = pneg %p132
        $region54: #{tpu_custom_call.1} parent=51 // pred_check_branch
          %361 = sbr.rel (%p359) target = $region56
        $region55: #{tpu_custom_call.1} parent=51 // pred_region
          %p362 = scmp.lt.s32.totalorder %s20, 1
          %s363 = scalar_select %p362, %s20, 1
          %s364 = smul.addr %s363, 8
          %s365 = smul.addr %s364, 4
          %s366 = scalar_lea.vmem %s4, %s365
        $region56: #{tpu_custom_call.1} parent=51 // pred_fallthru
          _
      $region52: #{tpu_custom_call.1} parent=5 // pred_fallthru
        _
    $region6: #{tpu_custom_call.1} parent=1 // loop_footer
      %s18 = sadd.s32 1, %s14
    $region7: #{tpu_custom_call.1} parent=1 // loop_footer_branch
      %13 = sbr.rel target = $region3
    $region8: #{tpu_custom_call.1} parent=1 // loop_exit
      _
    %367 = vsyncpa [#allocation3], 1
    %s368 = scalar_lea.sflag [#allocation3], 1
    %369 = vsyncpa %s368, 1
    %370 = vsyncpa [#allocation5], 1

</llo_original>
